<compile_context>
chip_gen: v5e
topology: v5e:2x2
jax: 0.10.0
libtpu: 0.0.40
codegen_flags: <defaults>
</compile_context>

<pallas_src>
import jax
import jax.numpy as jnp
from jax import lax
from jax.experimental import pallas as pl
from jax.experimental.pallas import tpu as pltpu


_F_CHUNK = 512                       # lanes per inner accumulation chunk (multiple of 128)
_UNROLL_MAX = 4                      # python-unroll the chunk loop up to this many chunks
_FALLBACK_VMEM = 64 * 1024 * 1024    # conservative per-core VMEM (v7x) if query fails


def _vmem_capacity_bytes() -> int:
    try:
        cap = getattr(pltpu.get_tpu_info(), "vmem_capacity_bytes", None)
        if cap:
            return int(cap)
    except Exception:
        pass
    return _FALLBACK_VMEM


def _round_up(v: int, m: int) -> int:
    return ((v + m - 1) // m) * m


def _round_down(v: int, m: int) -> int:
    return (v // m) * m


# ---------------------------------------------------------------------------
# Kernel body
# ---------------------------------------------------------------------------
def _row_sums(x_ref, w_ref, acc_ref, width, chunk_w):
    """f32 row sums of x[:, :width] * w[:, :width] for the current block.

    Accumulates per-chunk products into the (tile_n, chunk_w) f32 VMEM scratch
    (VPU adds only), then does ONE cross-lane (XLU) reduce.  The full
    (tile_n, width) product is never materialized and x is cast to f32 only one
    chunk at a time (native-dtype streaming).
    """
    nfull = width // chunk_w
    rem = width - nfull * chunk_w

    def prod(start):
        xs = x_ref[:, pl.ds(start, chunk_w)].astype(jnp.float32)
        ws = w_ref[:, pl.ds(start, chunk_w)].astype(jnp.float32)
        return xs * ws                                  # (tile_n, chunk_w), broadcast over rows

    y = None
    if nfull > 0:
        acc_ref[...] = prod(0)
        if 1 < nfull <= _UNROLL_MAX:
            for c in range(1, nfull):                   # static unroll, static offsets
                acc_ref[...] += prod(c * chunk_w)
        elif nfull > _UNROLL_MAX:
            def body(c, carry):
                start = pl.multiple_of(c * chunk_w, chunk_w)
                acc_ref[...] += prod(start)
                return carry
            lax.fori_loop(1, nfull, body, 0)
        y = jnp.sum(acc_ref[...], axis=-1, keepdims=True)       # (tile_n, 1) XLU reduce
    if rem > 0:                                         # static remainder (< chunk_w lanes)
        xs = x_ref[:, pl.ds(nfull * chunk_w, rem)].astype(jnp.float32)
        ws = w_ref[:, pl.ds(nfull * chunk_w, rem)].astype(jnp.float32)
        r = jnp.sum(xs * ws, axis=-1, keepdims=True)
        y = r if y is None else y + r
    return y


def _make_kernel(tile_k, nk, chunk_w, f_total):
    """Builds the kernel for a fixed (static) tiling."""
    rem_k = f_total - (nk - 1) * tile_k                 # valid width of the last k block

    def kernel(x_ref, w_ref, off_ref, o_ref, acc_ref):
        # x_ref  : (tile_n, tile_k)  VMEM  -- streamed activations, native dtype
        # w_ref  : (1, tile_k)       VMEM  -- pre-scaled f32 weight slice
        # off_ref: (1, 1)            SMEM  -- folded scalar offset = bias*scale + base
        # o_ref  : (tile_n, 1)       VMEM  -- f32 accumulator / decoded output block
        # acc_ref: (tile_n, chunk_w) VMEM  -- f32 chunk accumulator scratch
        k = pl.program_id(1)

        def accumulate(width):
            part = _row_sums(x_ref, w_ref, acc_ref, width, chunk_w)

            @pl.when(k == 0)
            def _():                                    # first K block: init + offset
                o_ref[...] = part + off_ref[0, 0]

            @pl.when(k > 0)
            def _():                                    # later K blocks: accumulate
                o_ref[...] = o_ref[...] + part

        if rem_k == tile_k:                             # F divides evenly (or Nk == 1)
            accumulate(tile_k)
        else:                                           # ragged last K block: only read
            @pl.when(k < nk - 1)                        # the valid columns so stale VMEM
            def _():                                    # padding never contaminates sums
                accumulate(tile_k)

            @pl.when(k == nk - 1)
            def _():
                accumulate(rem_k)

    return kernel


# ---------------------------------------------------------------------------
# Tiling choice (generation-aware via VMEM capacity)
# ---------------------------------------------------------------------------
def _choose_tiling(n, f, itemsize, vmem_cap):
    """Returns (tile_n, tile_k, chunk_w)."""
    sublane = max(8, 32 // itemsize)          # f32: 8, bf16/f16: 16, int8: 32
    budget = vmem_cap // 2                    # 2x x-buffers + weight + acc + out live here

    chunk_full = min(_F_CHUNK, f)
    # Bytes per batch row when streaming the full feature dim in one block:
    #   2*f*itemsize (double-buffered x) + 4*chunk (f32 acc) + 8 (double-buffered out)
    per_row_full = 2 * f * itemsize + 4 * chunk_full + 8
    max_rows_full = (budget - 8 * f) // per_row_full if budget > 8 * f else 0

    if max_rows_full >= n:
        return n, f, chunk_full                               # single block, no K split

    if max_rows_full >= sublane:
        # Batch-blocked, full feature rows.  Balance the grid for v7x's 2 TCs:
        # at least 4 roughly equal blocks, even count.
        max_tile = _round_down(max_rows_full, sublane)
        blocks = max(pl.cdiv(n, max_tile), 4)
        blocks += blocks % 2
        tile_n = min(_round_up(pl.cdiv(n, blocks), sublane), max_tile)
        return tile_n, f, chunk_full

    # A single feature row does not fit the budget: split F as well (o_ref is
    # the accumulator across the K grid axis).
    tile_n = n if n <= 256 else 256
    tile_k_max = (budget - tile_n * (4 * _F_CHUNK + 8)) // (2 * (tile_n * itemsize + 4))
    tile_k_max = min(tile_k_max, f)
    if tile_k_max >= _F_CHUNK:
        tile_k = _round_down(tile_k_max, _F_CHUNK)
    else:
        tile_k = max(128, _round_down(tile_k_max, 128))
    return tile_n, tile_k, min(_F_CHUNK, tile_k)


# ---------------------------------------------------------------------------
# Wrapper
# ---------------------------------------------------------------------------
def rot_regressor_forward(x_nchw, weight, bias, deg_min, deg_max, *,
                          _tile_override=None, _chunk_override=None):
    """
    x_nchw : (N, C, H, W), any float dtype -- streamed in its native dtype.
    weight : (in_features, 1) float32  (torch Linear weight, pre-transposed).
    bias   : (1,) float32.
    returns: (N,) float32 decoded degrees.
    """
    base = (deg_max + deg_min) / 2.0
    scale = (deg_max - deg_min) / 2.0

    n = x_nchw.shape[0]
    x_flat = x_nchw.reshape(n, -1)                       # Flatten(); keep native dtype
    f = x_flat.shape[1]
    assert weight.shape == (f, 1)
    itemsize = jnp.dtype(x_flat.dtype).itemsize

    # Fold the affine decode into the params (tiny one-off JAX ops):
    #   (x @ w + b)*scale + base == x @ (w*scale) + (b*scale + base)
    w_scaled = (weight.astype(jnp.float32) * scale).reshape(1, f)
    offset = bias.astype(jnp.float32).reshape(1, 1) * scale + base   # (1, 1)

    vmem_cap = _vmem_capacity_bytes()
    if _tile_override is not None:                       # test hook: force small tiles
        tile_n, tile_k = _tile_override
        chunk_w = min(_F_CHUNK, tile_k)
    else:
        tile_n, tile_k, chunk_w = _choose_tiling(n, f, itemsize, vmem_cap)
    if _chunk_override is not None:                      # test hook: force chunk width
        chunk_w = _chunk_override

    grid = (pl.cdiv(n, tile_n), pl.cdiv(f, tile_k))      # reduction (K) axis last
    kernel = _make_kernel(tile_k, grid[1], chunk_w, f)

    out = pl.pallas_call(
        kernel,
        out_shape=jax.ShapeDtypeStruct((n, 1), jnp.float32),
        grid=grid,
        in_specs=[
            # Streamed activations: native dtype, double-buffered by Pallas.
            pl.BlockSpec((tile_n, tile_k), lambda i, k: (i, k)),
            # Pre-scaled weight slice: constant along i; fully resident when Nk == 1.
            pl.BlockSpec((1, tile_k), lambda i, k: (0, k)),
            # Folded scalar offset lives in SMEM.
            pl.BlockSpec(memory_space=pltpu.MemorySpace.SMEM),
        ],
        # Constant along k -> resident f32 accumulator; written back per i block.
        out_specs=pl.BlockSpec((tile_n, 1), lambda i, k: (i, 0)),
        scratch_shapes=[pltpu.VMEM((tile_n, chunk_w), jnp.float32)],
        compiler_params=pltpu.CompilerParams(
            dimension_semantics=("parallel", "arbitrary"),
            vmem_limit_bytes=(vmem_cap * 3) // 4,        # 96 MiB on v5e/v6e, 48 MiB on v7x
        ),
        cost_estimate=pl.CostEstimate(
            flops=2 * n * f,
            transcendentals=0,
            bytes_accessed=int(n * f * itemsize + grid[0] * f * 4 + n * 4),
        ),
    )(x_flat, w_scaled, offset)

    return out[:, 0]                                     # .squeeze(-1)


# TODO(synk): RotRegressor.loss()/get_degrees()/correlation are training-time
# host-side code paths and are not implemented as kernels.

# ---------------------------------------------------------------------------
# Smoke tests
# ---------------------------------------------------------------------------
if __name__ == "__main__":
    N, C, H, W = 2, 4, 16, 16
    in_features = C * H * W
    deg_min, deg_max = -180.0, 180.0
    base = (deg_max + deg_min) / 2.0
    scale = (deg_max - deg_min) / 2.0

    key = jax.random.PRNGKey(0)
    kx, kw, kb, kx2, kx3 = jax.random.split(key, 5)

    weight = jax.random.normal(kw, (in_features, 1), dtype=jnp.float32) * 0.02
    bias = jax.random.normal(kb, (1,), dtype=jnp.float32) * 0.02

    def ref_fwd(x_any):
        xf = x_any.reshape(x_any.shape[0], -1).astype(jnp.float32)
        y = jnp.dot(xf, weight, precision=jax.lax.Precision.HIGHEST) + bias.reshape(1, 1)
        return (y * scale + base)[:, 0]

    # 1) Small f32 batch -> auto tiling, single (1, 1) grid block.
    x1 = jax.random.normal(kx, (N, C, H, W), dtype=jnp.float32)
    out1 = jax.block_until_ready(
        rot_regressor_forward(x1, weight, bias, deg_min, deg_max))
    assert out1.shape == (N,)
    assert jnp.allclose(out1, ref_fwd(x1), rtol=1e-4, atol=1e-3)

    # 2) bf16 activations with forced small tiles -> exercises Ni>1, Nk>1,
    #    ragged edges on both axes, and the output-as-accumulator K path.
    N2 = 70
    x2 = jax.random.normal(kx2, (N2, C, H, W), dtype=jnp.float32).astype(jnp.bfloat16)
    out2 = jax.block_until_ready(
        rot_regressor_forward(x2, weight, bias, deg_min, deg_max,
                              _tile_override=(32, 384)))
    assert out2.shape == (N2,)
    assert jnp.allclose(out2, ref_fwd(x2), rtol=2e-3, atol=5e-2)

    # 3) f32 with forced 128-lane chunks -> exercises the fori_loop chunk
    #    accumulator (aligned dynamic pl.ds offsets) and a ragged batch edge.
    N3 = 10
    x3 = jax.random.normal(kx3, (N3, C, H, W), dtype=jnp.float32)
    out3 = jax.block_until_ready(
        rot_regressor_forward(x3, weight, bias, deg_min, deg_max,
                              _tile_override=(8, in_features), _chunk_override=128))
    assert out3.shape == (N3,)
    assert jnp.allclose(out3, ref_fwd(x3), rtol=1e-4, atol=1e-3)

    print("KERNEL_OK")
</pallas_src>

<mosaic_0001>
module attributes {stable_mosaic.version = 11 : i64} {
  func.func @kernel(%arg0: i32, %arg1: i32, %arg2: memref<2x1024xf32, #tpu.memory_space<vmem>>, %arg3: memref<1x1024xf32, #tpu.memory_space<vmem>>, %arg4: memref<1x1xf32, #tpu.memory_space<smem>>, %arg5: memref<2x1xf32, #tpu.memory_space<vmem>>, %arg6: memref<2x512xf32, #tpu.memory_space<vmem>>) attributes {dimension_semantics = [#tpu.dimension_semantics<parallel>, #tpu.dimension_semantics<arbitrary>], iteration_bounds = array<i64: 1, 1>, scalar_prefetch = 0 : i64, scratch_operands = 1 : i64, tpu.core_type = #tpu.core_type<tc>, window_params = [{transform_indices = @transform_0, window_bounds = array<i64: 2, 1024>}, {transform_indices = @transform_1, window_bounds = array<i64: 1, 1024>}, {transform_indices = @transform_2, window_bounds = array<i64: 1, 1>}, {transform_indices = @transform_3, window_bounds = array<i64: 2, 1>}]} {
    %c0 = arith.constant 0 : index
    %c0_0 = arith.constant 0 : index
    %0 = vector.load %arg2[%c0, %c0_0] : memref<2x1024xf32, #tpu.memory_space<vmem>>, vector<2x512xf32>
    %c0_1 = arith.constant 0 : index
    %c0_2 = arith.constant 0 : index
    %1 = vector.load %arg3[%c0_1, %c0_2] : memref<1x1024xf32, #tpu.memory_space<vmem>>, vector<1x512xf32>
    %2 = vector.broadcast %1 : vector<1x512xf32> to vector<2x512xf32>
    %3 = arith.mulf %0, %2 : vector<2x512xf32>
    %c0_3 = arith.constant 0 : index
    %c0_4 = arith.constant 0 : index
    %4 = vector.load %arg6[%c0_3, %c0_4] : memref<2x512xf32, #tpu.memory_space<vmem>>, vector<2x512xf32>
    tpu.vector_store %arg6[%c0_3, %c0_4], %3 {strides = array<i32>} : memref<2x512xf32, #tpu.memory_space<vmem>>, vector<2x512xf32>,
    %c0_5 = arith.constant 0 : index
    %c0_6 = arith.constant 0 : index
    %5 = vector.load %arg6[%c0_5, %c0_6] : memref<2x512xf32, #tpu.memory_space<vmem>>, vector<2x512xf32>
    %c0_7 = arith.constant 0 : index
    %c512 = arith.constant 512 : index
    %6 = vector.load %arg2[%c0_7, %c512] : memref<2x1024xf32, #tpu.memory_space<vmem>>, vector<2x512xf32>
    %c0_8 = arith.constant 0 : index
    %c512_9 = arith.constant 512 : index
    %7 = vector.load %arg3[%c0_8, %c512_9] : memref<1x1024xf32, #tpu.memory_space<vmem>>, vector<1x512xf32>
    %8 = vector.broadcast %7 : vector<1x512xf32> to vector<2x512xf32>
    %9 = arith.mulf %6, %8 : vector<2x512xf32>
    %10 = arith.addf %5, %9 : vector<2x512xf32>
    %c0_10 = arith.constant 0 : index
    %c0_11 = arith.constant 0 : index
    %11 = vector.load %arg6[%c0_10, %c0_11] : memref<2x512xf32, #tpu.memory_space<vmem>>, vector<2x512xf32>
    tpu.vector_store %arg6[%c0_10, %c0_11], %10 {strides = array<i32>} : memref<2x512xf32, #tpu.memory_space<vmem>>, vector<2x512xf32>,
    %c0_12 = arith.constant 0 : index
    %c0_13 = arith.constant 0 : index
    %12 = vector.load %arg6[%c0_12, %c0_13] : memref<2x512xf32, #tpu.memory_space<vmem>>, vector<2x512xf32>
    %cst = arith.constant dense<0.000000e+00> : vector<2xf32>
    %13 = vector.multi_reduction <add>, %12, %cst [1] : vector<2x512xf32> to vector<2xf32>
    %14 = vector.shape_cast %13 : vector<2xf32> to vector<2x1xf32>
    %c0_i32 = arith.constant 0 : i32
    %15 = arith.cmpi eq, %arg1, %c0_i32 : i32
    %16 = arith.extui %15 : i1 to i32
    %c0_i32_14 = arith.constant 0 : i32
    %17 = arith.cmpi ne, %16, %c0_i32_14 : i32
    scf.if %17 {
      %c0_17 = arith.constant 0 : index
      %c0_18 = arith.constant 0 : index
      %21 = memref.load %arg4[%c0_17, %c0_18] : memref<1x1xf32, #tpu.memory_space<smem>>
      %22 = vector.broadcast %21 : f32 to vector<2x1xf32>
      %23 = arith.addf %14, %22 : vector<2x1xf32>
      %c0_19 = arith.constant 0 : index
      %c0_20 = arith.constant 0 : index
      %24 = vector.load %arg5[%c0_19, %c0_20] : memref<2x1xf32, #tpu.memory_space<vmem>>, vector<2x1xf32>
      tpu.vector_store %arg5[%c0_19, %c0_20], %23 {strides = array<i32>} : memref<2x1xf32, #tpu.memory_space<vmem>>, vector<2x1xf32>,
    } else {
    }
    %c0_i32_15 = arith.constant 0 : i32
    %18 = arith.cmpi sgt, %arg1, %c0_i32_15 : i32
    %19 = arith.extui %18 : i1 to i32
    %c0_i32_16 = arith.constant 0 : i32
    %20 = arith.cmpi ne, %19, %c0_i32_16 : i32
    scf.if %20 {
      %c0_17 = arith.constant 0 : index
      %c0_18 = arith.constant 0 : index
      %21 = vector.load %arg5[%c0_17, %c0_18] : memref<2x1xf32, #tpu.memory_space<vmem>>, vector<2x1xf32>
      %22 = arith.addf %21, %14 : vector<2x1xf32>
      %c0_19 = arith.constant 0 : index
      %c0_20 = arith.constant 0 : index
      %23 = vector.load %arg5[%c0_19, %c0_20] : memref<2x1xf32, #tpu.memory_space<vmem>>, vector<2x1xf32>
      tpu.vector_store %arg5[%c0_19, %c0_20], %22 {strides = array<i32>} : memref<2x1xf32, #tpu.memory_space<vmem>>, vector<2x1xf32>,
    } else {
    }
    return
  }
  func.func @transform_0(%arg0: i32, %arg1: i32) -> (i32, i32) {
    %c0_i32 = arith.constant 0 : i32
    return %arg0, %arg1 : i32, i32
  }
  func.func @transform_1(%arg0: i32, %arg1: i32) -> (i32, i32) {
    %c0_i32 = arith.constant 0 : i32
    %c0_i32_0 = arith.constant 0 : i32
    return %c0_i32, %arg1 : i32, i32
  }
  func.func @transform_2(%arg0: i32, %arg1: i32) -> (i32, i32) {
    %c0_i32 = arith.constant 0 : i32
    %c0_i32_0 = arith.constant 0 : i32
    %c0_i32_1 = arith.constant 0 : i32
    return %c0_i32, %c0_i32_0 : i32, i32
  }
  func.func @transform_3(%arg0: i32, %arg1: i32) -> (i32, i32) {
    %c0_i32 = arith.constant 0 : i32
    %c0_i32_0 = arith.constant 0 : i32
    return %arg0, %c0_i32 : i32, i32
  }
}

</mosaic_0001>

<llo_original>
// kernel: tpu_custom_call.1
$region0: #{tpu_custom_call.1}
  #allocation0 [shape = 'u32[]', space=smem, size = 0x4, offset = 0x4, fixed_abs, tag = 'smem constant byte address 0x4 - core index']
  #allocation1 [shape = 'u32[72,128]{1,0:T(1,128)}', space=vmem, size = 0x9000, scoped, tag = 'internal scratch']
  #allocation2 [shape = 'f32[2,512]{1,0:T(2,128)}', space=vmem, size = 0x1000, scoped, tag = 'scratch operand']
  #allocation3 [shape = 'f32[1,1]{1,0:T(1,128)S(6)}', space=smem, size = 0x200, scoped, tag = 'scoped memory for tpu_custom_call.1']
  %s0 = inlined_call_operand.hbm [shape: f32[2,1024], index: 0, kind: input, shape index: {}]
  %s1 = inlined_call_operand.hbm [shape: f32[1,1024], index: 1, kind: input, shape index: {}]
  %s2 = inlined_call_operand.<no memory space> [shape: f32[1,1], index: 2, kind: input, shape index: {}]
  %s3 = inlined_call_operand.vmem [shape: f32[2,1], index: 3, kind: output, shape index: {}]
  %s4 = sld [smem:[#allocation0]]
  $region38: #{tpu_custom_call.1} parent=0
    _
  %s6 = ssub.s32 1, %s4
  %s7 = scalar_select 0, %s6, %s4
  %8 = sst [smem:[#allocation3]] %s2
  $region1: #{tpu_custom_call.1} parent=0
    #allocation4 [shape = 'u8[8192]{0}', space=vmem, size = 0x2000, scoped, tag = 'input window, operand 0, single buffered']
    #allocation5 [shape = 's32[1]{0}', space=sflag, size = 0x4, scoped, tag = 'scoped memory for tpu_custom_call.1']
    #allocation6 [shape = 'u8[4096]{0}', space=vmem, size = 0x1000, scoped, tag = 'input window, operand 1, single buffered']
    #allocation7 [shape = 's32[1]{0}', space=sflag, size = 0x4, scoped, tag = 'scoped memory for tpu_custom_call.1']
    %9 = vsyncpa [#allocation5], 0
    %10 = vsyncpa [#allocation7], 0
    // Predicated region
    $region2: #{tpu_custom_call.1} parent=1 // pred_check
      _
    $region3: #{tpu_custom_call.1} parent=1 // pred_check_branch
      %12 = sbr.rel (0) target = $region5
    $region4: #{tpu_custom_call.1} parent=1 // pred_region
      %14 = vsyncadd [#allocation5], 0
      %s16 = sshll.u32 %s0, 4
      %s17 = int_to_ptr.hbm [resolvable:$true] %s16
      %s18 = sshll.u32 [#allocation4], 4
      %s19 = int_to_ptr.vmem [resolvable:$true] %s18
      %21 = dma.hbm_to_vmem [thread:$0]  %s17, 256, %s19, [#allocation5]
    $region5: #{tpu_custom_call.1} parent=1 // pred_fallthru
      _
    // Predicated region
    $region6: #{tpu_custom_call.1} parent=1 // pred_check
      _
    $region7: #{tpu_custom_call.1} parent=1 // pred_check_branch
      %23 = sbr.rel (0) target = $region9
    $region8: #{tpu_custom_call.1} parent=1 // pred_region
      %25 = vsyncadd [#allocation7], 0
      %s27 = sshll.u32 %s1, 4
      %s28 = int_to_ptr.hbm [resolvable:$true] %s27
      %s29 = sshll.u32 [#allocation6], 4
      %s30 = int_to_ptr.vmem [resolvable:$true] %s29
      %32 = dma.hbm_to_vmem [thread:$0]  %s28, 128, %s30, [#allocation7]
    $region9: #{tpu_custom_call.1} parent=1 // pred_fallthru
      _
    // Predicated region
    $region10: #{tpu_custom_call.1} parent=1 // pred_check
      _
    $region11: #{tpu_custom_call.1} parent=1 // pred_check_branch
      %34 = sbr.rel (0) target = $region13
    $region12: #{tpu_custom_call.1} parent=1 // pred_region
      _
    $region13: #{tpu_custom_call.1} parent=1 // pred_fallthru
      _
    // Predicated region
    $region14: #{tpu_custom_call.1} parent=1 // pred_check
      _
    $region15: #{tpu_custom_call.1} parent=1 // pred_check_branch
      %36 = sbr.rel (0) target = $region17
    $region16: #{tpu_custom_call.1} parent=1 // pred_region
      %38 = dma.done [#allocation5], 256
    $region17: #{tpu_custom_call.1} parent=1 // pred_fallthru
      _
    // Predicated region
    $region18: #{tpu_custom_call.1} parent=1 // pred_check
      _
    $region19: #{tpu_custom_call.1} parent=1 // pred_check_branch
      %40 = sbr.rel (0) target = $region21
    $region20: #{tpu_custom_call.1} parent=1 // pred_region
      %42 = dma.done [#allocation7], 128
    $region21: #{tpu_custom_call.1} parent=1 // pred_fallthru
      _
    %v43 = vld [vmem:[#allocation4] sm:$0xff]
    %v44 = vld [vmem:[#allocation6] sm:$0xf]
    %v46 = vperm.slane %v44, 0
    %v47 = vperm.slane %v44, 1
    %v48 = vperm.slane %v44, 2
    %v49 = vperm.slane %v44, 3
    %v50 = vrot.slane %v47, 6
    %v51 = vrot.slane %v48, 4
    %v52 = vrot.slane %v49, 2
    %vm53 = vcmask 1041408
    %v54 = vsel %vm53, %v46, %v50
    %vm55 = vcmask 1045508
    %v56 = vsel %vm55, %v51, %v52
    %vm57 = vcmask 1043456
    %v58 = vsel %vm57, %v54, %v56
    %v60 = vmul.f32 %v43, %v58
    %61 = vst [vmem:[#allocation2] sm:$0xff] %v60
    %v62 = vld [vmem:[#allocation2] sm:$0xff]
    %v63 = vld [vmem:[#allocation4 + $0x8] sm:$0xff]
    %v64 = vld [vmem:[#allocation6 + $0x4] sm:$0xf]
    %v66 = vperm.slane %v64, 0
    %v67 = vperm.slane %v64, 1
    %v68 = vperm.slane %v64, 2
    %v69 = vperm.slane %v64, 3
    %v70 = vrot.slane %v67, 6
    %v71 = vrot.slane %v68, 4
    %v72 = vrot.slane %v69, 2
    %v73 = vsel %vm53, %v66, %v70
    %v74 = vsel %vm55, %v71, %v72
    %v75 = vsel %vm57, %v73, %v74
    %v77 = vmul.f32 %v63, %v75
    %v78 = vadd.f32 %v62, %v77
    %79 = vst [vmem:[#allocation2] sm:$0xff] %v78
    %v80 = vld [vmem:[#allocation2] sm:$0xff]
    %82 = vst [vmem:[#allocation1] ss:$4 sm:$0xff] %v80
    %v83 = vld.sshfl [vmem:[#allocation1] sm:$0xff pattern:$0x73625140]
    %v84 = vld.sshfl [vmem:[#allocation1 + $0x8] sm:$0xff pattern:$0x73625140]
    %v85 = vld.sshfl [vmem:[#allocation1 + $0x10] sm:$0xff pattern:$0x73625140]
    %v86 = vld.sshfl [vmem:[#allocation1 + $0x18] sm:$0xff pattern:$0x73625140]
    %v91 = vsel %vm53, %v83, 0.0
    %v92 = vsel %vm53, %v84, 0.0
    %v93 = vadd.f32 %v91, %v92
    %v94 = vsel %vm53, %v85, 0.0
    %v95 = vadd.f32 %v93, %v94
    %v96 = vsel %vm53, %v86, 0.0
    %v97 = vadd.f32 %v95, %v96
    %98 = vadd.xlane.f32.xlu0 %v97
    %v99 = vpop.xlane.xlu0 %98
    %p100 = scmp.eq.s32.totalorder 0, 0
    // Predicated region
    $region22: #{tpu_custom_call.1} parent=1 // pred_check
      %p101 = pneg %p100
    $region23: #{tpu_custom_call.1} parent=1 // pred_check_branch
      %103 = sbr.rel (%p101) target = $region25
    $region24: #{tpu_custom_call.1} parent=1 // pred_region
      %s104 = sld [smem:[#allocation3]]
      %v105 = vstv %s104
      %v106 = vadd.f32 %v99, %v105
      %vm107 = vcmask 1024
      %108 = vst.msk [vmem:[%s3] sm:$0x3] %vm107, %v106
    $region25: #{tpu_custom_call.1} parent=1 // pred_fallthru
      _
    %p109 = scmp.gt.s32.totalorder 0, 0
    // Predicated region
    $region26: #{tpu_custom_call.1} parent=1 // pred_check
      %p110 = pneg %p109
    $region27: #{tpu_custom_call.1} parent=1 // pred_check_branch
      %112 = sbr.rel (%p110) target = $region29
    $region28: #{tpu_custom_call.1} parent=1 // pred_region
      %v113 = vld [vmem:[%s3] sm:$0x3]
      %v114 = vadd.f32 %v113, %v99
      %vm115 = vcmask 1024
      %116 = vst.msk [vmem:[%s3] sm:$0x3] %vm115, %v114
    $region29: #{tpu_custom_call.1} parent=1 // pred_fallthru
      _
    // Predicated region
    $region30: #{tpu_custom_call.1} parent=1 // pred_check
      _
    $region31: #{tpu_custom_call.1} parent=1 // pred_check_branch
      %118 = sbr.rel (0) target = $region33
    $region32: #{tpu_custom_call.1} parent=1 // pred_region
      _
    $region33: #{tpu_custom_call.1} parent=1 // pred_fallthru
      _
    // Predicated region
    $region34: #{tpu_custom_call.1} parent=1 // pred_check
      _
    $region35: #{tpu_custom_call.1} parent=1 // pred_check_branch
      %120 = sbr.rel (0) target = $region37
    $region36: #{tpu_custom_call.1} parent=1 // pred_region
      _
    $region37: #{tpu_custom_call.1} parent=1 // pred_fallthru
      _
    %121 = vsyncpa [#allocation5], 1
    %122 = vsyncpa [#allocation7], 1

</llo_original>
